<compile_context>
chip_gen: v7x
topology: tpu7x:2x2x1
jax: 0.10.0
libtpu: 0.0.40
codegen_flags: <defaults>
</compile_context>

<pallas_src>
import jax
import jax.numpy as jnp
from jax.experimental import pallas as pl
from jax.experimental.pallas import tpu as pltpu


def _round_up(x, m):
    return ((x + m - 1) // m) * m


def _patch_embed_kernel(x_ref, w_ref, b_ref, o_ref):
    # x_ref: (tm, Kp) patch rows; w_ref: (Kp, Ep); b_ref: (1, Ep) f32;
    # o_ref: (tm, Ep) out_dtype.  MXU matmul with f32 accumulation.
    acc = jnp.dot(x_ref[...], w_ref[...], preferred_element_type=jnp.float32)
    o_ref[...] = (acc + b_ref[...]).astype(o_ref.dtype)


def prepare_patch_embed_params(weight, bias, compute_dtype=jnp.bfloat16,
                               lane_multiple=128):
    """One-time parameter prep (cache the result; do NOT redo per forward).

    weight: (E, C, P, P) OIHW conv weight; bias: (E,) or None.
    Returns (wm, bm): wm (Kp, Ep) in compute_dtype with rows in (c, kh, kw)
    order; bm (1, Ep) float32.  K / E are zero-padded to `lane_multiple`
    (128 keeps stores lane-dense on every generation; 256 fills a full
    v6e/v7x MXU tile but costs extra padded bytes on a bandwidth-bound op).
    On v7x, fp8 compute_dtype is an option (halves x/w DMA bytes) but needs
    accuracy validation.
    """
    E, C, P, _ = weight.shape
    K = C * P * P
    Kp = _round_up(K, lane_multiple)
    Ep = _round_up(E, lane_multiple)
    wm = weight.reshape(E, K).T.astype(compute_dtype)            # (K, E)
    wm = jnp.pad(wm, ((0, Kp - K), (0, Ep - E)))                 # (Kp, Ep)
    if bias is None:
        bias = jnp.zeros((E,), jnp.float32)
    bm = jnp.pad(bias.astype(jnp.float32), (0, Ep - E)).reshape(1, Ep)
    return wm, bm


def _choose_tm(M, Kp, Ep, in_itemsize, out_itemsize, tm_target,
               vmem_budget_bytes):
    """Pick the M-row tile.

    Sized so the double-buffered x / out tiles plus the (double-buffered)
    resident weight stay under `vmem_budget_bytes`; capped at tm_target; when
    the whole problem would otherwise be one block, split in two so the 1-D
    "parallel" grid can feed both v7x TensorCores.
    """
    bytes_per_row = 2 * Kp * in_itemsize + 2 * Ep * out_itemsize
    resident = 2 * Kp * Ep * in_itemsize + 2 * Ep * 4            # weight + bias
    budget = max(vmem_budget_bytes - resident, 64 * bytes_per_row)
    tm = min(tm_target, budget // bytes_per_row)
    tm = max(16, (tm // 16) * 16)
    if tm >= M:
        half = (M + 1) // 2
        tm = _round_up(half if M > 256 else M, 16)
    return int(tm)


def patch_embed_pallas(x, wm, bm, patch_size, embed_dim, *,
                       compute_dtype=jnp.bfloat16, out_dtype=None,
                       channels_last=False, tm_target=1024,
                       vmem_limit_bytes=32 * 1024 * 1024):
    """Patch-embedding Conv2d(kernel=stride=patch_size) as a Pallas MXU matmul.

    x: (B, C, H, W).  wm/bm from prepare_patch_embed_params (same
    compute_dtype).  Returns (B, embed_dim, H//P, W//P) like nn.Conv2d, or
    (B, H//P, W//P, embed_dim) if channels_last=True (skips one HBM pass).
    out_dtype defaults to x.dtype; pass jnp.bfloat16 to halve output writes.
    """
    B, C, H, W = x.shape
    P = patch_size
    gh, gw = H // P, W // P
    E = embed_dim
    K = C * P * P
    Kp, Ep = wm.shape
    M = B * gh * gw
    out_dtype = x.dtype if out_dtype is None else jnp.dtype(out_dtype)
    in_itemsize = jnp.dtype(compute_dtype).itemsize
    out_itemsize = jnp.dtype(out_dtype).itemsize

    tm = _choose_tm(M, Kp, Ep, in_itemsize, out_itemsize, tm_target,
                    int(vmem_limit_bytes * 0.85))
    Mp = _round_up(M, tm)

    # im2col for stride == kernel: one XLA transpose/reshape/cast/pad chain.
    # With allow_input_fusion below, XLA may fold it straight into the kernel's
    # input DMA so the (Mp, Kp) matrix is never materialized in HBM.
    # TODO(synk): do this permutation fully in-kernel once Mosaic supports the
    # required >2-D transpose; BlockSpec index maps alone cannot express the
    # (C, kh) <-> (gh, gw) interleave of NCHW.
    xp = x.reshape(B, C, gh, P, gw, P)
    xp = jnp.transpose(xp, (0, 2, 4, 1, 3, 5))            # (B, gh, gw, C, P, P)
    xp = xp.reshape(M, K).astype(compute_dtype)           # (M, K)
    if Mp != M or Kp != K:
        xp = jnp.pad(xp, ((0, Mp - M), (0, Kp - K)))      # (Mp, Kp)

    grid = (Mp // tm,)
    out = pl.pallas_call(
        _patch_embed_kernel,
        out_shape=jax.ShapeDtypeStruct((Mp, Ep), out_dtype),
        grid_spec=pltpu.PrefetchScalarGridSpec(
            num_scalar_prefetch=0,
            grid=grid,
            in_specs=[
                pl.BlockSpec((tm, Kp), lambda i: (i, 0)),   # patch rows, pipelined
                pl.BlockSpec((Kp, Ep), lambda i: (0, 0)),   # weight, resident
                pl.BlockSpec((1, Ep), lambda i: (0, 0)),    # bias, resident
            ],
            out_specs=pl.BlockSpec((tm, Ep), lambda i: (i, 0)),
        ),
        compiler_params=pltpu.CompilerParams(
            dimension_semantics=("parallel",),          # megacore shards M (v7x)
            allow_input_fusion=[True, False, False],    # fold im2col into x DMA
            vmem_limit_bytes=int(vmem_limit_bytes),
        ),
        cost_estimate=pl.CostEstimate(
            flops=2 * Mp * Kp * Ep,
            bytes_accessed=(Mp * Kp * in_itemsize + Kp * Ep * in_itemsize
                            + Ep * 4 + Mp * Ep * out_itemsize),
            transcendentals=0,
        ),
    )(xp, wm, bm)

    out = out[:M, :E].reshape(B, gh, gw, E)               # lane-dense, channels-last
    if channels_last:
        return out
    # nn.Conv2d semantics require NCHW; this costs one extra HBM pass.
    return jnp.transpose(out, (0, 3, 1, 2))


if __name__ == "__main__":
    # Small shapes consistent with the module: img_size=16, patch_size=4,
    # in_chans=4, embed_dim=32, batch=2.
    B, C, H, W = 2, 4, 16, 16
    P, E = 4, 32

    key = jax.random.PRNGKey(0)
    kx, kw, kb = jax.random.split(key, 3)
    x = jax.random.normal(kx, (B, C, H, W), dtype=jnp.float32)
    weight = jax.random.normal(kw, (E, C, P, P), dtype=jnp.float32) * 0.02
    bias = jax.random.normal(kb, (E,), dtype=jnp.float32) * 0.02

    # One-time parameter prep (cache outside the hot path in real use).
    wm, bm = prepare_patch_embed_params(weight, bias)

    fwd = jax.jit(lambda xx: patch_embed_pallas(xx, wm, bm, P, E))
    out = jax.block_until_ready(fwd(x))

    # Reference: plain-JAX f32 conv (same math as nn.Conv2d).
    ref = jax.lax.conv_general_dilated(
        x, weight, window_strides=(P, P), padding="VALID",
        dimension_numbers=("NCHW", "OIHW", "NCHW"),
    ) + bias.reshape(1, E, 1, 1)

    assert out.shape == (B, E, H // P, W // P), out.shape
    # bf16 MXU inputs with f32 accumulation: relaxed tolerance vs f32 reference.
    assert jnp.allclose(out, ref, atol=2e-2, rtol=2e-2), \
        float(jnp.max(jnp.abs(out - ref)))
    print("KERNEL_OK")
</pallas_src>

<mosaic_0001>
module attributes {stable_mosaic.version = 11 : i64} {
  func.func @_patch_embed_kernel(%arg0: i32, %arg1: memref<32x128xbf16, #tpu.memory_space<vmem>>, %arg2: memref<128x128xbf16, #tpu.memory_space<vmem>>, %arg3: memref<1x128xf32, #tpu.memory_space<vmem>>, %arg4: memref<32x128xf32, #tpu.memory_space<vmem>>) attributes {dimension_semantics = [#tpu.dimension_semantics<parallel>], iteration_bounds = array<i64: 1>, scalar_prefetch = 0 : i64, scratch_operands = 0 : i64, tpu.core_type = #tpu.core_type<tc>, window_params = [{transform_indices = @transform_0, window_bounds = array<i64: 32, 128>}, {pipeline_mode = #tpu.pipeline_mode<synchronous>, transform_indices = @transform_1, window_bounds = array<i64: 128, 128>}, {pipeline_mode = #tpu.pipeline_mode<synchronous>, transform_indices = @transform_2, window_bounds = array<i64: 1, 128>}, {transform_indices = @transform_3, window_bounds = array<i64: 32, 128>}]} {
    %c0 = arith.constant 0 : index
    %c0_0 = arith.constant 0 : index
    %0 = vector.load %arg1[%c0, %c0_0] : memref<32x128xbf16, #tpu.memory_space<vmem>>, vector<32x128xbf16>
    %c0_1 = arith.constant 0 : index
    %c0_2 = arith.constant 0 : index
    %1 = vector.load %arg2[%c0_1, %c0_2] : memref<128x128xbf16, #tpu.memory_space<vmem>>, vector<128x128xbf16>
    %cst = arith.constant dense<0.000000e+00> : vector<32x128xf32>
    %2 = tpu.matmul %0, %1, %cst {dimension_numbers = #tpu.dot_dimension_numbers<[1], [0], [0], [1], [0, 0, 1, 1], [], []>} : vector<32x128xbf16>, vector<128x128xbf16>, vector<32x128xf32> -> vector<32x128xf32>
    %c0_3 = arith.constant 0 : index
    %c0_4 = arith.constant 0 : index
    %3 = vector.load %arg3[%c0_3, %c0_4] : memref<1x128xf32, #tpu.memory_space<vmem>>, vector<1x128xf32>
    %4 = vector.broadcast %3 : vector<1x128xf32> to vector<32x128xf32>
    %5 = arith.addf %2, %4 : vector<32x128xf32>
    %c0_5 = arith.constant 0 : index
    %c0_6 = arith.constant 0 : index
    %6 = vector.load %arg4[%c0_5, %c0_6] : memref<32x128xf32, #tpu.memory_space<vmem>>, vector<32x128xf32>
    tpu.vector_store %arg4[%c0_5, %c0_6], %5 {strides = array<i32>} : memref<32x128xf32, #tpu.memory_space<vmem>>, vector<32x128xf32>,
    return
  }
  func.func @transform_0(%arg0: i32) -> (i32, i32) {
    %c0_i32 = arith.constant 0 : i32
    %c0_i32_0 = arith.constant 0 : i32
    return %arg0, %c0_i32 : i32, i32
  }
  func.func @transform_1(%arg0: i32) -> (i32, i32) {
    %c0_i32 = arith.constant 0 : i32
    %c0_i32_0 = arith.constant 0 : i32
    %c0_i32_1 = arith.constant 0 : i32
    return %c0_i32, %c0_i32_0 : i32, i32
  }
  func.func @transform_2(%arg0: i32) -> (i32, i32) {
    %c0_i32 = arith.constant 0 : i32
    %c0_i32_0 = arith.constant 0 : i32
    %c0_i32_1 = arith.constant 0 : i32
    return %c0_i32, %c0_i32_0 : i32, i32
  }
  func.func @transform_3(%arg0: i32) -> (i32, i32) {
    %c0_i32 = arith.constant 0 : i32
    %c0_i32_0 = arith.constant 0 : i32
    return %arg0, %c0_i32 : i32, i32
  }
}

</mosaic_0001>

<llo_original>
// kernel: _lambda_.2
$region0: #{_lambda_.2}
  #allocation0 [shape = 'u32[]', space=smem, size = 0x4, offset = 0x4, fixed_abs, tag = 'smem constant byte address 0x4 - core index']
  #allocation1 [shape = 'u32[144,128]{1,0:T(1,128)}', space=vmem, size = 0x12000, scoped, tag = 'internal scratch']
  #allocation2 [shape = 'u32[2048]{0}', space=vmem, size = 0x2000, scoped, tag = 'scoped memory for _lambda_.2']
  #allocation3 [shape = 'u32[2048]{0}', space=vmem, size = 0x2000, scoped, tag = 'scoped memory for _lambda_.2']
  #allocation4 [shape = 'u32[2048]{0}', space=vmem, size = 0x2000, scoped, tag = 'scoped memory for _lambda_.2']
  #allocation5 [shape = 'u32[2048]{0}', space=vmem, size = 0x2000, scoped, tag = 'scoped memory for _lambda_.2']
  #allocation6 [shape = 'u32[2048]{0}', space=vmem, size = 0x2000, scoped, tag = 'scoped memory for _lambda_.2']
  %s0 = inlined_call_operand.vmem [shape: bf16[128,128], index: 0, kind: input, shape index: {}]
  %s1 = inlined_call_operand.vmem [shape: f32[1,128], index: 1, kind: input, shape index: {}]
  %s2 = inlined_call_operand.vmem [shape: bf16[32,64], index: 2, kind: input, shape index: {}]
  %s3 = inlined_call_operand.<no memory space> [shape: bf16[], index: 3, kind: input, shape index: {}]
  %s4 = inlined_call_operand.hbm [shape: f32[32,128], index: 4, kind: output, shape index: {}]
  %s5 = sld [smem:[#allocation0]]
  $region22: #{_lambda_.2} parent=0
    _
  %s7 = ssub.s32 1, %s5
  %s8 = scalar_select 0, %s7, %s5
  %v9 = vstv %s3
  %v10 = vunpack.i.l.bf16 %v9
  %v12 = vunpack.i.h.bf16 %v9
  $region1: #{_lambda_.2} parent=0
    #allocation7 [shape = 'u8[16384]{0}', space=vmem, size = 0x4000, scoped, tag = 'output window, operand 0, single buffered']
    #allocation8 [shape = 's32[1]{0}', space=sflag, size = 0x4, scoped, tag = 'scoped memory for _lambda_.2']
    #allocation9 [shape = 'u8[8192]{0}', space=vmem, size = 0x2000, dematerialized = true, scoped, tag = 'FusionAdapter Buffer %fusion.1 = bf16[32,128]{1,0:T(8,128)(2,1)} fusion(%param_2.1, %param_3), kind=kLoop, calls=%fused_computation.2.clone, metadata={op_name="jit(<lambda>)/jit(_pad)/pad" stack_frame_id=12}']
    %14 = vsyncpa [#allocation8], 0
    // Predicated region
    $region2: #{_lambda_.2} parent=1 // pred_check
      _
    $region3: #{_lambda_.2} parent=1 // pred_check_branch
      %16 = sbr.rel (0) target = $region5
    $region4: #{_lambda_.2} parent=1 // pred_region
      _
    $region5: #{_lambda_.2} parent=1 // pred_fallthru
      _
    // Predicated region
    $region6: #{_lambda_.2} parent=1 // pred_check
      _
    $region7: #{_lambda_.2} parent=1 // pred_check_branch
      %18 = sbr.rel (0) target = $region9
    $region8: #{_lambda_.2} parent=1 // pred_region
      _
    $region9: #{_lambda_.2} parent=1 // pred_fallthru
      _
    // Predicated region
    $region10: #{_lambda_.2} parent=1 // pred_check
      _
    $region11: #{_lambda_.2} parent=1 // pred_check_branch
      %20 = sbr.rel (0) target = $region13
    $region12: #{_lambda_.2} parent=1 // pred_region
      _
    $region13: #{_lambda_.2} parent=1 // pred_fallthru
      _
    %s22 = sor.u32 255, 127
    %s23 = sand.u32 %s22, 85
    %s24 = sshrl.u32 %s23, 1
    %s25 = sor.u32 %s23, %s24
    %s26 = sand.u32 51, %s25
    %s27 = sshrl.u32 %s26, 2
    %s28 = sor.u32 %s26, %s27
    %s29 = sand.u32 15, %s28
    %v30 = vld [vmem:[%s2] sm:%s29]
    %v31 = vunpack.c.l.bf16 %v30
    %v32 = vunpack.c.h.bf16 %v30
    %v33 = vlaneseq
    %v34 = vand.u32 %v33, 127
    %vm36 = vcmp.lt.s32.totalorder %v34, 64
    %v37 = vsel %vm36, %v31, %v10
    %v38 = vpack.c.bf16 0.0, %v37
    %40 = vst [vmem:[#allocation9] sm:$0xf] %v38
    %s41 = scalar_lea.vmem %s2, 4
    %s43 = sor.u32 255, 127
    %s44 = sand.u32 %s43, 85
    %s45 = sshrl.u32 %s44, 1
    %s46 = sor.u32 %s44, %s45
    %s47 = sand.u32 51, %s46
    %s48 = sshrl.u32 %s47, 2
    %s49 = sor.u32 %s47, %s48
    %s50 = sand.u32 15, %s49
    %v51 = vld [vmem:[%s41] sm:%s50]
    %v52 = vunpack.c.l.bf16 %v51
    %v53 = vunpack.c.h.bf16 %v51
    %v54 = vlaneseq
    %v55 = vand.u32 %v54, 127
    %vm57 = vcmp.lt.s32.totalorder %v55, 64
    %v58 = vsel %vm57, %v52, %v10
    %s59 = scalar_lea.vmem [#allocation9], 4
    %v60 = vpack.c.bf16 0.0, %v58
    %62 = vst [vmem:[%s59] sm:$0xf] %v60
    %s63 = scalar_lea.vmem %s2, 8
    %s65 = sor.u32 255, 127
    %s66 = sand.u32 %s65, 85
    %s67 = sshrl.u32 %s66, 1
    %s68 = sor.u32 %s66, %s67
    %s69 = sand.u32 51, %s68
    %s70 = sshrl.u32 %s69, 2
    %s71 = sor.u32 %s69, %s70
    %s72 = sand.u32 15, %s71
    %v73 = vld [vmem:[%s63] sm:%s72]
    %v74 = vunpack.c.l.bf16 %v73
    %v75 = vunpack.c.h.bf16 %v73
    %v76 = vlaneseq
    %v77 = vand.u32 %v76, 127
    %vm79 = vcmp.lt.s32.totalorder %v77, 64
    %v80 = vsel %vm79, %v74, %v10
    %s81 = scalar_lea.vmem [#allocation9], 8
    %v82 = vpack.c.bf16 0.0, %v80
    %84 = vst [vmem:[%s81] sm:$0xf] %v82
    %s85 = scalar_lea.vmem %s2, 12
    %s87 = sor.u32 255, 127
    %s88 = sand.u32 %s87, 85
    %s89 = sshrl.u32 %s88, 1
    %s90 = sor.u32 %s88, %s89
    %s91 = sand.u32 51, %s90
    %s92 = sshrl.u32 %s91, 2
    %s93 = sor.u32 %s91, %s92
    %s94 = sand.u32 15, %s93
    %v95 = vld [vmem:[%s85] sm:%s94]
    %v96 = vunpack.c.l.bf16 %v95
    %v97 = vunpack.c.h.bf16 %v95
    %v98 = vlaneseq
    %v99 = vand.u32 %v98, 127
    %vm101 = vcmp.lt.s32.totalorder %v99, 64
    %v102 = vsel %vm101, %v96, %v10
    %s103 = scalar_lea.vmem [#allocation9], 12
    %v104 = vpack.c.bf16 0.0, %v102
    %106 = vst [vmem:[%s103] sm:$0xf] %v104
    %v108 = vld [vmem:[#allocation9] sm:$0xf]
    %v109 = vld [vmem:[#allocation9 + $0x4] sm:$0xf]
    %v110 = vld [vmem:[#allocation9 + $0x8] sm:$0xf]
    %v111 = vld [vmem:[#allocation9 + $0xc] sm:$0xf]
    %v112 = vld [vmem:[%s0] sm:$0xff]
    %v113 = vld [vmem:[%s0 + $0x8] sm:$0xff]
    %v114 = vld [vmem:[%s0 + $0x10] sm:$0xff]
    %v115 = vld [vmem:[%s0 + $0x18] sm:$0xff]
    %v116 = vld [vmem:[%s0 + $0x20] sm:$0xff]
    %v117 = vld [vmem:[%s0 + $0x28] sm:$0xff]
    %v118 = vld [vmem:[%s0 + $0x30] sm:$0xff]
    %v119 = vld [vmem:[%s0 + $0x38] sm:$0xff]
    %v120 = vld [vmem:[%s1] sm:$0x1]
    %v122 = vlaneseq
    %v123 = vshrl.u32 %v122, 7
    %v124 = vsub.s32 0, %v123
    %v125 = vrot.slane %v120, %v124
    %v131 = vunpack.c.l.b16 %v108
    %v132 = vunpack.c.l.b16 %v109
    %v133 = vunpack.c.l.b16 %v110
    %v134 = vunpack.c.l.b16 %v111
    %v135 = vpack.c.b16 %v132, %v131
    %v136 = vpack.c.b16 %v134, %v133
    %139 = vmatprep.subr.bf16.mxu0 0
    %140 = vmatpush1.bf16.msra.mxu0 %v112
    %141 = vmatprep.subr.bf16.mxu0 0
    %142 = vmatpush1.bf16.msra.mxu0 %v113
    %143 = vmatprep.subr.bf16.mxu0 0
    %144 = vmatpush1.bf16.msra.mxu0 %v114
    %145 = vmatprep.subr.bf16.mxu0 0
    %146 = vmatpush1.bf16.msra.mxu0 %v115
    %147 = vmatprep.subr.bf16.mxu0 0
    %148 = vmatpush1.bf16.msra.mxu0 %v116
    %149 = vmatprep.subr.bf16.mxu0 0
    %150 = vmatpush1.bf16.msra.mxu0 %v117
    %151 = vmatprep.subr.bf16.mxu0 0
    %152 = vmatpush1.bf16.msra.mxu0 %v118
    %153 = vmatprep.subr.bf16.mxu0 0
    %154 = vmatpush1.bf16.msra.mxu0 %v119
    %155 = vmatprep.subr.bf16.mxu0 0
    %156 = vmatpush1.bf16.msra.mxu0 0
    %157 = vmatprep.subr.bf16.mxu0 0
    %158 = vmatpush1.bf16.msra.mxu0 0
    %159 = vmatprep.subr.bf16.mxu0 0
    %160 = vmatpush1.bf16.msra.mxu0 0
    %161 = vmatprep.subr.bf16.mxu0 0
    %162 = vmatpush1.bf16.msra.mxu0 0
    %163 = vmatprep.subr.bf16.mxu0 0
    %164 = vmatpush1.bf16.msra.mxu0 0
    %165 = vmatprep.subr.bf16.mxu0 0
    %166 = vmatpush1.bf16.msra.mxu0 0
    %167 = vmatprep.subr.bf16.mxu0 0
    %168 = vmatpush1.bf16.msra.mxu0 0
    %169 = vmatprep.subr.bf16.mxu0 0
    %170 = vmatpush1.bf16.msra.mxu0 0
    %171 = vmatprep.mubr.bf16.mxu0 0
    %172 = vmatmul.mubr.bf16.gmra.mrb[0].mxu0 %v135
    %v173 = vpop.f32.mrb[0].mxu0
    %v174 = vadd.f32 %v125, %v173
    %v175 = vpop.f32.mrb[0].mxu0
    %v176 = vpop.f32.mrb[0].mxu0
    %v177 = vadd.f32 %v125, %v176
    %v178 = vpop.f32.mrb[0].mxu0
    %179 = vmatprep.mubr.bf16.mxu0 0
    %180 = vmatmul.mubr.bf16.gmra.mrb[0].mxu0 %v136
    %v181 = vpop.f32.mrb[0].mxu0
    %v182 = vadd.f32 %v125, %v181
    %v183 = vpop.f32.mrb[0].mxu0
    %v184 = vpop.f32.mrb[0].mxu0
    %v185 = vadd.f32 %v125, %v184
    %v186 = vpop.f32.mrb[0].mxu0
    %187 = vdwg.mxu0
    %188 = vst [vmem:[#allocation7] sm:$0xff] %v174
    %189 = vst [vmem:[#allocation7 + $0x8] sm:$0xff] %v177
    %190 = vst [vmem:[#allocation7 + $0x10] sm:$0xff] %v182
    %191 = vst [vmem:[#allocation7 + $0x18] sm:$0xff] %v185
    // Predicated region
    $region14: #{_lambda_.2} parent=1 // pred_check
      _
    $region15: #{_lambda_.2} parent=1 // pred_check_branch
      %193 = sbr.rel (0) target = $region17
    $region16: #{_lambda_.2} parent=1 // pred_region
      %s195 = ssub.s32 512, 512
      %196 = vsyncadd [#allocation8], %s195
      %s197 = sshll.u32 [#allocation7], 4
      %s198 = int_to_ptr.vmem [resolvable:$true] %s197
      %203 = dma.vmem_to_hbm [thread:$0]  %s198, 512, %s4, [#allocation8], 128, 128, 8
    $region17: #{_lambda_.2} parent=1 // pred_fallthru
      _
    // Predicated region
    $region18: #{_lambda_.2} parent=1 // pred_check
      _
    $region19: #{_lambda_.2} parent=1 // pred_check_branch
      %205 = sbr.rel (0) target = $region21
    $region20: #{_lambda_.2} parent=1 // pred_region
      %206 = dma.done [#allocation8], 512
    $region21: #{_lambda_.2} parent=1 // pred_fallthru
      _
    %207 = vsyncpa [#allocation8], 1

</llo_original>
